<compile_context>
chip_gen: v7x
topology: tpu7x:2x2x1
jax: 0.10.0
libtpu: 0.0.40
codegen_flags: <defaults>
</compile_context>

<pallas_src>
import functools

import jax
import jax.numpy as jnp
from jax.experimental import pallas as pl
from jax.experimental.pallas import tpu as pltpu


_LANES = 128


@functools.lru_cache(maxsize=None)
def _vmem_limit_bytes():
    """Scoped-VMEM budget: ~half of physical VMEM, clamped to [32, 96] MiB.

    v5e/v6e (128 MiB physical) -> 64 MiB; v7x (64 MiB physical) -> 32 MiB.
    Falls back to a conservative 32 MiB if the hardware query is unavailable.
    """
    try:
        cap = getattr(pltpu.get_tpu_info(), "vmem_capacity_bytes", None)
    except Exception:
        cap = None
    if not cap:
        return 32 * 1024 * 1024
    return int(min(96 * 1024 * 1024, max(32 * 1024 * 1024, cap // 2)))


def _focal_pow(one_minus_pt, gamma):
    g = float(gamma)
    if g.is_integer() and g >= 0:
        # keep integral powers off the exp/log path (single EUP slot)
        return jax.lax.integer_pow(one_minus_pt, int(g))
    return one_minus_pt ** g


# ----------------------------------------------------------------------------
# Packed layout kernel (small C): rows on the 128 lanes, classes on sublanes.
#   preds_ref : (tb, C, 128) native dtype
#   labels_ref: (tb, 1, 128) int32    (pad rows carry label -1)
#   alphag_ref: (tb, 1, 128) float32  (per-row alpha, pad rows carry 0)
#   out_ref   : (1, 1, 128)  float32  lane-dense per-tile partial sums
# ----------------------------------------------------------------------------
def _focal_kernel_packed(preds_ref, labels_ref, alphag_ref, out_ref, *, gamma):
    x = preds_ref[...].astype(jnp.float32)                       # (tb, C, L)
    tb, C, L = x.shape

    # numerically-stable log-softmax pieces along the class (sublane) axis
    m = jnp.max(x, axis=1, keepdims=True)                        # (tb, 1, L)
    sh = x - m
    lse = jnp.log(jnp.sum(jnp.exp(sh), axis=1, keepdims=True))   # (tb, 1, L)

    labels = labels_ref[...]                                     # (tb, 1, L)
    cls = jax.lax.broadcasted_iota(jnp.int32, (tb, C, L), 1)
    # select-then-reduce instead of a float one-hot (no cast, no extra mul);
    # pad rows have label=-1 -> the select never fires -> finite logpt.
    sel = jnp.where(cls == labels, sh, 0.0)                      # (tb, C, L)
    logpt = jnp.sum(sel, axis=1, keepdims=True) - lse            # (tb, 1, L)
    pt = jnp.exp(logpt)

    # pad rows have alpha_g == 0, so their loss is exactly zero -> no row mask
    loss = -_focal_pow(1.0 - pt, gamma) * logpt * alphag_ref[...]  # (tb, 1, L)

    # lane-dense partial: reduce the row (major) axis only, keep the 128 lanes
    out_ref[...] = jnp.sum(loss, axis=0, keepdims=True)          # (1, 1, L)


# ----------------------------------------------------------------------------
# Lanes layout kernel (C >= 128): classes on lanes, natural [rows, C] blocks.
# ----------------------------------------------------------------------------
def _focal_kernel_lanes(preds_ref, labels_ref, alphag_ref, out_ref, *,
                        gamma, total_rows):
    i = pl.program_id(0)
    x = preds_ref[...].astype(jnp.float32)                       # (tm, C)
    tm, C = x.shape

    m = jnp.max(x, axis=-1, keepdims=True)
    sh = x - m
    lse = jnp.log(jnp.sum(jnp.exp(sh), axis=-1, keepdims=True))  # (tm, 1)

    labels = labels_ref[...]                                     # (tm, 1)
    col = jax.lax.broadcasted_iota(jnp.int32, (tm, C), 1)
    sel = jnp.where(col == labels, sh, 0.0)
    logpt = jnp.sum(sel, axis=-1, keepdims=True) - lse           # (tm, 1)
    pt = jnp.exp(logpt)

    loss = -_focal_pow(1.0 - pt, gamma) * logpt * alphag_ref[...]  # (tm, 1)

    # mask Pallas boundary-block rows (garbage beyond the real row count);
    # where() is a select, so NaN/Inf in masked rows cannot leak in.
    row = jax.lax.broadcasted_iota(jnp.int32, (tm, 1), 0) + i * tm
    loss = jnp.where(row < total_rows, loss, 0.0)

    out_ref[...] = jnp.sum(loss).reshape(1, 1, 1)                # per-tile sum


# ----------------------------------------------------------------------------
# Wrappers
# ----------------------------------------------------------------------------
def _focal_loss_packed(preds2d, labels1d, alpha_row, gamma, tb=None):
    """Small-C path: repack [M, C] -> [Tp, C, 128] (rows on lanes)."""
    M, C = preds2d.shape
    L = _LANES
    T = pl.cdiv(M, L)                          # number of 128-row groups

    if tb is None:
        # ~2 MiB (f32, sublane-padded) preds block per buffer -> tb=512 at C<=8
        c_pad = ((C + 7) // 8) * 8
        tb = max(1, (2 * 1024 * 1024) // (c_pad * L * 4))
    tb = max(1, min(tb, T))
    if T >= 2:
        tb = min(tb, pl.cdiv(T, 2))            # keep G >= 2 (v7x megacore)
    G = pl.cdiv(T, tb)
    Tp = G * tb
    Mp = Tp * L

    if Mp != M:
        # pad rows: preds=0, labels=-1, alpha=0  =>  pad rows contribute 0
        preds2d = jnp.pad(preds2d, ((0, Mp - M), (0, 0)))
        labels1d = jnp.pad(labels1d, ((0, Mp - M),), constant_values=-1)
        alpha_row = jnp.pad(alpha_row, ((0, Mp - M),))
    # TODO(synk): for very large M, produce preds already in [Tp, C, 128] layout
    # upstream; this repack is an extra HBM pass in front of a mem-bound kernel.
    preds_packed = preds2d.reshape(Tp, L, C).transpose(0, 2, 1)   # [Tp, C, L]
    labels_packed = labels1d.reshape(Tp, 1, L)
    alpha_packed = alpha_row.reshape(Tp, 1, L)

    kernel = functools.partial(_focal_kernel_packed, gamma=float(gamma))
    partials = pl.pallas_call(
        kernel,
        out_shape=jax.ShapeDtypeStruct((G, 1, L), jnp.float32),
        grid=(G,),
        in_specs=[
            pl.BlockSpec((tb, C, L), lambda i: (i, 0, 0)),   # preds (packed)
            pl.BlockSpec((tb, 1, L), lambda i: (i, 0, 0)),   # labels (packed)
            pl.BlockSpec((tb, 1, L), lambda i: (i, 0, 0)),   # per-row alpha
        ],
        out_specs=pl.BlockSpec((1, 1, L), lambda i: (i, 0, 0)),
        compiler_params=pltpu.CompilerParams(
            dimension_semantics=("parallel",),
            vmem_limit_bytes=_vmem_limit_bytes()),
    )(preds_packed, labels_packed, alpha_packed)
    return jnp.sum(partials)


def _focal_loss_lanes(preds2d, labels1d, alpha_row, gamma, tm=None):
    """Large-C path: natural [M, C] layout, no wrapper pad / upcast."""
    M, C = preds2d.shape
    itemsize = jnp.dtype(preds2d.dtype).itemsize
    sub = {4: 8, 2: 16, 1: 32}.get(itemsize, 8)   # sublane multiple by dtype

    if tm is None:
        # ~2 MiB of preds per block (amortize ~0.35us/step overhead), cap 2048
        tm = min(2048, (2 * 1024 * 1024) // max(1, C * itemsize))
    tm = max(sub, (tm // sub) * sub)
    if M <= tm:
        tm = M                     # single full-extent block (always legal)
    G = pl.cdiv(M, tm)             # >= 2 automatically once M > ~2048 rows

    labels2d = labels1d.reshape(-1, 1)
    alpha2d = alpha_row.reshape(-1, 1)

    kernel = functools.partial(_focal_kernel_lanes,
                               gamma=float(gamma), total_rows=M)
    partials = pl.pallas_call(
        kernel,
        out_shape=jax.ShapeDtypeStruct((G, 1, 1), jnp.float32),
        grid=(G,),
        in_specs=[
            pl.BlockSpec((tm, C), lambda i: (i, 0)),   # preds rows
            pl.BlockSpec((tm, 1), lambda i: (i, 0)),   # labels rows
            pl.BlockSpec((tm, 1), lambda i: (i, 0)),   # per-row alpha
        ],
        out_specs=pl.BlockSpec((1, 1, 1), lambda i: (i, 0, 0)),
        compiler_params=pltpu.CompilerParams(
            dimension_semantics=("parallel",),
            vmem_limit_bytes=_vmem_limit_bytes()),
    )(preds2d, labels2d, alpha2d)
    return jnp.sum(partials)


def focal_loss(preds, labels, alpha, gamma=2.0, reduction="mean"):
    """preds: [B, N, C] or [B, C] float (native dtype, bf16 ok);
    labels: [B, N] or [B] int; alpha: [C] float.
    Matches PyTorch FocalLoss.forward for reduction 'mean'/'sum'."""
    C = preds.shape[-1]
    preds2d = preds.reshape(-1, C)                    # keep native dtype
    labels1d = labels.reshape(-1).astype(jnp.int32)
    M = preds2d.shape[0]
    alpha = jnp.asarray(alpha, jnp.float32)
    # per-row alpha gather done once in the wrapper (removes a full-tile
    # multiply + cross-class reduce from the kernels)
    alpha_row = alpha[labels1d]

    if C < _LANES:
        total = _focal_loss_packed(preds2d, labels1d, alpha_row, gamma)
    else:
        total = _focal_loss_lanes(preds2d, labels1d, alpha_row, gamma)

    if reduction == "mean":
        return total / jnp.float32(M)
    if reduction == "sum":
        return total
    # TODO(synk): reduction='none' (per-element losses) needs a per-row output
    # spec; only 'mean' and 'sum' are implemented here.
    raise NotImplementedError("reduction must be 'mean' or 'sum'")


def focal_loss_ref(preds, labels, alpha, gamma=2.0, reduction="mean"):
    """Pure-JAX reference mirroring the PyTorch forward."""
    C = preds.shape[-1]
    p = preds.reshape(-1, C).astype(jnp.float32)
    l = labels.reshape(-1).astype(jnp.int32)
    logsoft = jax.nn.log_softmax(p, axis=1)
    logpt = jnp.take_along_axis(logsoft, l[:, None], axis=1)[:, 0]
    pt = jnp.exp(logpt)
    a = alpha[l]
    loss = -a * ((1.0 - pt) ** gamma) * logpt
    return jnp.mean(loss) if reduction == "mean" else jnp.sum(loss)


if __name__ == "__main__":
    def make_alpha(class_num, a=0.25):
        # deterministic alpha construction, as in FocalLoss.__init__
        alpha = jnp.zeros((class_num,), jnp.float32)
        alpha = alpha.at[0].add(a)
        alpha = alpha.at[1:].add(1.0 - a)
        return alpha

    key = jax.random.PRNGKey(0)

    # --- 1) default detection setup: class_num=3 (packed path), tiny shapes --
    cn = 3
    alpha = make_alpha(cn)
    k1, k2, key = jax.random.split(key, 3)
    preds = jax.random.normal(k1, (2, 8, cn), dtype=jnp.float32)
    labels = jax.random.randint(k2, (2, 8), 0, cn, dtype=jnp.int32)
    out = jax.block_until_ready(focal_loss(preds, labels, alpha, gamma=2.0))
    ref = focal_loss_ref(preds, labels, alpha, gamma=2.0)
    assert jnp.allclose(out, ref, rtol=1e-5, atol=1e-6), (out, ref)

    # non-integer gamma exercises the float-pow path
    out = jax.block_until_ready(focal_loss(preds, labels, alpha, gamma=1.5))
    ref = focal_loss_ref(preds, labels, alpha, gamma=1.5)
    assert jnp.allclose(out, ref, rtol=1e-5, atol=1e-6), (out, ref)

    # --- 2) packed path with multi-block grid (G=2) and row padding ----------
    k1, k2, key = jax.random.split(key, 3)
    preds = jax.random.normal(k1, (4, 150, cn), dtype=jnp.float32)
    labels = jax.random.randint(k2, (4, 150), 0, cn, dtype=jnp.int32)
    out = jax.block_until_ready(focal_loss(preds, labels, alpha, gamma=2.0))
    ref = focal_loss_ref(preds, labels, alpha, gamma=2.0)
    assert jnp.allclose(out, ref, rtol=1e-5, atol=1e-5), (out, ref)

    # bf16 preds end-to-end (cast to f32 only inside the kernel)
    preds_bf16 = preds.astype(jnp.bfloat16)
    out = jax.block_until_ready(focal_loss(preds_bf16, labels, alpha, gamma=2.0))
    ref = focal_loss_ref(preds_bf16, labels, alpha, gamma=2.0)
    assert jnp.allclose(out, ref, rtol=1e-4, atol=1e-4), (out, ref)

    # --- 3) wide-class case (class-on-lanes path), ragged row count ----------
    cn = 256
    alpha = make_alpha(cn)
    k1, k2, key = jax.random.split(key, 3)
    preds = jax.random.normal(k1, (2, 5, cn), dtype=jnp.float32)
    labels = jax.random.randint(k2, (2, 5), 0, cn, dtype=jnp.int32)
    out = jax.block_until_ready(
        focal_loss(preds, labels, alpha, gamma=2.0, reduction="sum"))
    ref = focal_loss_ref(preds, labels, alpha, gamma=2.0, reduction="sum")
    assert jnp.allclose(out, ref, rtol=1e-5, atol=1e-5), (out, ref)

    # same data through the lanes path with a forced small row tile:
    # exercises the boundary-block row mask across a G=2 grid
    p2d = preds.reshape(-1, cn)
    l1d = labels.reshape(-1).astype(jnp.int32)
    out = jax.block_until_ready(
        _focal_loss_lanes(p2d, l1d, alpha[l1d], gamma=2.0, tm=8))
    assert jnp.allclose(out, ref, rtol=1e-5, atol=1e-5), (out, ref)

    print("KERNEL_OK")
</pallas_src>

<mosaic_0001>
module attributes {stable_mosaic.version = 11 : i64} {
  func.func @_focal_kernel_packed(%arg0: i32, %arg1: memref<1x3x128xf32, #tpu.memory_space<vmem>>, %arg2: memref<1x1x128xi32, #tpu.memory_space<vmem>>, %arg3: memref<1x1x128xf32, #tpu.memory_space<vmem>>, %arg4: memref<1x1x128xf32, #tpu.memory_space<vmem>>) attributes {dimension_semantics = [#tpu.dimension_semantics<parallel>], iteration_bounds = array<i64: 1>, scalar_prefetch = 0 : i64, scratch_operands = 0 : i64, tpu.core_type = #tpu.core_type<tc>, window_params = [{transform_indices = @transform_0, window_bounds = array<i64: 1, 3, 128>}, {transform_indices = @transform_1, window_bounds = array<i64: 1, 1, 128>}, {transform_indices = @transform_2, window_bounds = array<i64: 1, 1, 128>}, {transform_indices = @transform_3, window_bounds = array<i64: 1, 1, 128>}]} {
    %c0 = arith.constant 0 : index
    %c0_0 = arith.constant 0 : index
    %c0_1 = arith.constant 0 : index
    %0 = vector.load %arg1[%c0, %c0_0, %c0_1] : memref<1x3x128xf32, #tpu.memory_space<vmem>>, vector<1x3x128xf32>
    %cst = arith.constant dense<0xFF800000> : vector<1x128xf32>
    %1 = vector.multi_reduction <maximumf>, %0, %cst [1] : vector<1x3x128xf32> to vector<1x128xf32>
    %2 = vector.shape_cast %1 : vector<1x128xf32> to vector<1x1x128xf32>
    %3 = vector.broadcast %2 : vector<1x1x128xf32> to vector<1x3x128xf32>
    %4 = arith.subf %0, %3 : vector<1x3x128xf32>
    %5 = math.exp %4 : vector<1x3x128xf32>
    %cst_2 = arith.constant dense<0.000000e+00> : vector<1x128xf32>
    %6 = vector.multi_reduction <add>, %5, %cst_2 [1] : vector<1x3x128xf32> to vector<1x128xf32>
    %7 = vector.shape_cast %6 : vector<1x128xf32> to vector<1x1x128xf32>
    %8 = math.log %7 : vector<1x1x128xf32>
    %c0_3 = arith.constant 0 : index
    %c0_4 = arith.constant 0 : index
    %c0_5 = arith.constant 0 : index
    %9 = vector.load %arg2[%c0_3, %c0_4, %c0_5] : memref<1x1x128xi32, #tpu.memory_space<vmem>>, vector<1x1x128xi32>
    %10 = tpu.iota {dimensions = array<i32: 1>} : vector<1x3x128xi32>
    %11 = vector.broadcast %9 : vector<1x1x128xi32> to vector<1x3x128xi32>
    %12 = arith.cmpi eq, %10, %11 : vector<1x3x128xi32>
    %cst_6 = arith.constant 0.000000e+00 : f32
    %13 = vector.broadcast %cst_6 : f32 to vector<1x3x128xf32>
    %14 = arith.select %12, %4, %13 : vector<1x3x128xi1>, vector<1x3x128xf32>
    %cst_7 = arith.constant dense<0.000000e+00> : vector<1x128xf32>
    %15 = vector.multi_reduction <add>, %14, %cst_7 [1] : vector<1x3x128xf32> to vector<1x128xf32>
    %16 = vector.shape_cast %15 : vector<1x128xf32> to vector<1x1x128xf32>
    %17 = arith.subf %16, %8 : vector<1x1x128xf32>
    %18 = math.exp %17 : vector<1x1x128xf32>
    %cst_8 = arith.constant 1.000000e+00 : f32
    %19 = vector.broadcast %cst_8 : f32 to vector<1x1x128xf32>
    %20 = arith.subf %19, %18 : vector<1x1x128xf32>
    %21 = arith.mulf %20, %20 : vector<1x1x128xf32>
    %cst_9 = arith.constant 0.000000e+00 : f32
    %22 = vector.broadcast %cst_9 : f32 to vector<1x1x128xf32>
    %23 = arith.subf %22, %21 : vector<1x1x128xf32>
    %24 = arith.mulf %23, %17 : vector<1x1x128xf32>
    %c0_10 = arith.constant 0 : index
    %c0_11 = arith.constant 0 : index
    %c0_12 = arith.constant 0 : index
    %25 = vector.load %arg3[%c0_10, %c0_11, %c0_12] : memref<1x1x128xf32, #tpu.memory_space<vmem>>, vector<1x1x128xf32>
    %26 = arith.mulf %24, %25 : vector<1x1x128xf32>
    %cst_13 = arith.constant dense<0.000000e+00> : vector<1x128xf32>
    %27 = vector.multi_reduction <add>, %26, %cst_13 [0] : vector<1x1x128xf32> to vector<1x128xf32>
    %28 = vector.shape_cast %27 : vector<1x128xf32> to vector<1x1x128xf32>
    %c0_14 = arith.constant 0 : index
    %c0_15 = arith.constant 0 : index
    %c0_16 = arith.constant 0 : index
    %29 = vector.load %arg4[%c0_14, %c0_15, %c0_16] : memref<1x1x128xf32, #tpu.memory_space<vmem>>, vector<1x1x128xf32>
    tpu.vector_store %arg4[%c0_14, %c0_15, %c0_16], %28 {strides = array<i32>} : memref<1x1x128xf32, #tpu.memory_space<vmem>>, vector<1x1x128xf32>,
    return
  }
  func.func @transform_0(%arg0: i32) -> (i32, i32, i32) {
    %c0_i32 = arith.constant 0 : i32
    %c0_i32_0 = arith.constant 0 : i32
    %c0_i32_1 = arith.constant 0 : i32
    return %arg0, %c0_i32, %c0_i32_0 : i32, i32, i32
  }
  func.func @transform_1(%arg0: i32) -> (i32, i32, i32) {
    %c0_i32 = arith.constant 0 : i32
    %c0_i32_0 = arith.constant 0 : i32
    %c0_i32_1 = arith.constant 0 : i32
    return %arg0, %c0_i32, %c0_i32_0 : i32, i32, i32
  }
  func.func @transform_2(%arg0: i32) -> (i32, i32, i32) {
    %c0_i32 = arith.constant 0 : i32
    %c0_i32_0 = arith.constant 0 : i32
    %c0_i32_1 = arith.constant 0 : i32
    return %arg0, %c0_i32, %c0_i32_0 : i32, i32, i32
  }
  func.func @transform_3(%arg0: i32) -> (i32, i32, i32) {
    %c0_i32 = arith.constant 0 : i32
    %c0_i32_0 = arith.constant 0 : i32
    %c0_i32_1 = arith.constant 0 : i32
    return %arg0, %c0_i32, %c0_i32_0 : i32, i32, i32
  }
}

</mosaic_0001>

<llo_original>
// kernel: tpu_custom_call.1
$region0: #{tpu_custom_call.1}
  #allocation0 [shape = 'u32[]', space=smem, size = 0x4, offset = 0x4, fixed_abs, tag = 'smem constant byte address 0x4 - core index']
  #allocation1 [shape = 'u32[144,128]{1,0:T(1,128)}', space=vmem, size = 0x12000, scoped, tag = 'internal scratch']
  %s0 = inlined_call_operand.vmem [shape: f32[1,3,128], index: 0, kind: input, shape index: {}]
  %s1 = inlined_call_operand.vmem [shape: s32[1,1,128], index: 1, kind: input, shape index: {}]
  %s2 = inlined_call_operand.vmem [shape: f32[1,1,128], index: 2, kind: input, shape index: {}]
  %s3 = inlined_call_operand.hbm [shape: f32[1,1,128], index: 3, kind: output, shape index: {}]
  %s4 = sld [smem:[#allocation0]]
  $region22: #{tpu_custom_call.1} parent=0
    _
  %s6 = ssub.s32 1, %s4
  %s7 = scalar_select 0, %s6, %s4
  $region1: #{tpu_custom_call.1} parent=0
    #allocation2 [shape = 'u8[512]{0}', space=vmem, size = 0x400, scoped, tag = 'output window, operand 0, single buffered']
    #allocation3 [shape = 's32[1]{0}', space=sflag, size = 0x4, scoped, tag = 'scoped memory for tpu_custom_call.1']
    %8 = vsyncpa [#allocation3], 0
    // Predicated region
    $region2: #{tpu_custom_call.1} parent=1 // pred_check
      _
    $region3: #{tpu_custom_call.1} parent=1 // pred_check_branch
      %10 = sbr.rel (0) target = $region5
    $region4: #{tpu_custom_call.1} parent=1 // pred_region
      _
    $region5: #{tpu_custom_call.1} parent=1 // pred_fallthru
      _
    // Predicated region
    $region6: #{tpu_custom_call.1} parent=1 // pred_check
      _
    $region7: #{tpu_custom_call.1} parent=1 // pred_check_branch
      %12 = sbr.rel (0) target = $region9
    $region8: #{tpu_custom_call.1} parent=1 // pred_region
      _
    $region9: #{tpu_custom_call.1} parent=1 // pred_fallthru
      _
    // Predicated region
    $region10: #{tpu_custom_call.1} parent=1 // pred_check
      _
    $region11: #{tpu_custom_call.1} parent=1 // pred_check_branch
      %14 = sbr.rel (0) target = $region13
    $region12: #{tpu_custom_call.1} parent=1 // pred_region
      _
    $region13: #{tpu_custom_call.1} parent=1 // pred_fallthru
      _
    %v15 = vld [vmem:[%s0] sm:$0x7]
    %vm16 = vcmask 1042432
    %v17 = vsel %vm16, %v15, -inf
    %v18 = vrot.slane %v17, 4
    %v19 = vmax.f32 %v17, %v18
    %v20 = vrot.slane %v19, 2
    %v21 = vmax.f32 %v19, %v20
    %v22 = vrot.slane %v21, 1
    %v23 = vmax.f32 %v21, %v22
    %v24 = vsub.f32 %v15, %v23
    %v25 = vmul.f32 %v24, 1.442695
    %v26 = vpow.pop %v25
    %v27 = vsel %vm16, %v26, 0.0
    %v28 = vrot.slane %v27, 4
    %v29 = vadd.f32 %v27, %v28
    %v30 = vrot.slane %v29, 2
    %v31 = vadd.f32 %v29, %v30
    %v32 = vrot.slane %v31, 1
    %v33 = vadd.f32 %v31, %v32
    %v34 = vlog2.pop %v33
    %v35 = vmul.f32 %v34, 0.6931472
    %v36 = vld [vmem:[%s1] sm:$0x1]
    %v37 = vlaneseq
    %v38 = vshrl.u32 %v37, 7
    %v39 = vlaneseq
    %v40 = vshrl.u32 %v39, 7
    %v41 = vsub.s32 0, %v40
    %v42 = vrot.slane %v36, %v41
    %vm43 = vcmp.eq.s32.totalorder %v38, %v42
    %v44 = vsel %vm43, %v24, 0.0
    %v45 = vsel %vm16, %v44, 0.0
    %v46 = vrot.slane %v45, 4
    %v47 = vadd.f32 %v45, %v46
    %v48 = vrot.slane %v47, 2
    %v49 = vadd.f32 %v47, %v48
    %v50 = vrot.slane %v49, 1
    %v51 = vadd.f32 %v49, %v50
    %v52 = vsub.f32 %v51, %v35
    %v53 = vmul.f32 %v52, 1.442695
    %v54 = vpow.pop %v53
    %v55 = vsub.f32 1.0, %v54
    %v56 = vmul.f32 %v55, %v55
    %v57 = vsub.f32 0.0, %v56
    %v58 = vmul.f32 %v57, %v52
    %v59 = vld [vmem:[%s2] sm:$0x1]
    %v60 = vmul.f32 %v58, %v59
    %v61 = vadd.f32 %v60, 0.0
    %62 = vst [vmem:[#allocation2] sm:$0x1] %v61
    // Predicated region
    $region14: #{tpu_custom_call.1} parent=1 // pred_check
      _
    $region15: #{tpu_custom_call.1} parent=1 // pred_check_branch
      %64 = sbr.rel (0) target = $region17
    $region16: #{tpu_custom_call.1} parent=1 // pred_region
      %s66 = ssub.s32 16, 16
      %67 = vsyncadd [#allocation3], %s66
      %s69 = sshll.u32 [#allocation2], 4
      %s70 = int_to_ptr.vmem [resolvable:$true] %s69
      %72 = dma.vmem_to_hbm [thread:$0]  %s70, 16, %s3, [#allocation3]
    $region17: #{tpu_custom_call.1} parent=1 // pred_fallthru
      _
    // Predicated region
    $region18: #{tpu_custom_call.1} parent=1 // pred_check
      _
    $region19: #{tpu_custom_call.1} parent=1 // pred_check_branch
      %74 = sbr.rel (0) target = $region21
    $region20: #{tpu_custom_call.1} parent=1 // pred_region
      %75 = dma.done [#allocation3], 16
    $region21: #{tpu_custom_call.1} parent=1 // pred_fallthru
      _
    %76 = vsyncpa [#allocation3], 1

</llo_original>
